<compile_context>
chip_gen: v6e
topology: v6e:2x2x1
jax: 0.10.0
libtpu: 0.0.40
codegen_flags: <defaults>
</compile_context>

<pallas_src>
import math
import functools

import jax
import jax.numpy as jnp
from jax.experimental import pallas as pl
from jax.experimental.pallas import tpu as pltpu


_MASK_VALUE = -1e30   # finite "minus infinity": exp() underflows to 0, never NaN


def _self_attention_kernel(x_ref, wqkv_ref, wproj_ref, o_ref, *,
                           num_heads, seq_len, kv_tile, mxu_dtype):
    # x_ref:     (rows, C)      rows = batch_tile * T   (batch folded into rows)
    # wqkv_ref:  (C, 3C)        fused q|k|v projection (x @ W layout), bf16
    # wproj_ref: (H, hs, C)     per-head slices of the output projection, bf16
    # o_ref:     (rows, C)
    rows, C = x_ref.shape
    T = seq_len
    bt = rows // T                      # batch elements in this grid step
    H = num_heads
    hs = C // H
    n = H * bt                          # independent (head, batch) attention problems
    scale = 1.0 / math.sqrt(hs)

    # bf16 MXU operands, f32 accumulation.  (No blanket f32 upcast of the row
    # slab -- it is narrowed, not widened.)
    x = x_ref[...].astype(mxu_dtype)                                    # (rows, C)

    # One fused lane-dense projection: (rows, C) @ (C, 3C).  The 3C output
    # lanes keep the MXU columns full instead of 3*H separate hs-wide dots.
    qkv = jnp.dot(x, wqkv_ref[...].astype(mxu_dtype),
                  preferred_element_type=jnp.float32)                   # (rows, 3C) f32

    def split_heads(two_d):
        # (rows, C) -> (H*bt, T, hs): one-time head-split layout step (lane
        # slices + stack on a new leading axis).  The (H, bt*T, hs) ->
        # (H*bt, T, hs) reshape is layout-preserving (T is a sublane multiple).
        parts = [two_d[:, h * hs:(h + 1) * hs] for h in range(H)]
        return jnp.stack(parts, axis=0).reshape(n, T, hs)

    # Fold 1/sqrt(hs) into q (T*hs work instead of T*T); MXU operands in bf16.
    q3 = split_heads(qkv[:, 0:C] * scale).astype(mxu_dtype)             # (n, T, hs)
    k3 = split_heads(qkv[:, C:2 * C]).astype(mxu_dtype)
    v3 = split_heads(qkv[:, 2 * C:3 * C]).astype(mxu_dtype)

    q_idx = jax.lax.broadcasted_iota(jnp.int32, (T, 1), 0)              # query positions

    def masked_scores(k_blk, k_start, k_len):
        # Batched QK^T for every (head, batch) pair + causal mask (finite fill).
        s = jnp.einsum("ntd,nud->ntu", q3, k_blk,
                       preferred_element_type=jnp.float32)              # (n, T, k_len)
        k_idx = k_start + jax.lax.broadcasted_iota(jnp.int32, (T, k_len), 1)
        return jnp.where((q_idx >= k_idx)[None], s, _MASK_VALUE)

    n_kv = T // kv_tile
    if n_kv == 1:
        # Single-pass softmax (small T): the whole (n, T, T) score tile is cheap.
        s = masked_scores(k3, 0, T)
        m = jnp.max(s, axis=-1, keepdims=True)
        p = jnp.exp(s - m)                                              # f32 statistics
        l = jnp.sum(p, axis=-1, keepdims=True)
        acc = jnp.einsum("ntu,nud->ntd", p.astype(mxu_dtype), v3,
                         preferred_element_type=jnp.float32)            # (n, T, hs)
    else:
        # Flash-style online softmax over KV chunks: only an (n, T, kv_tile)
        # score tile is live, never the O(T^2) tensor.  Statically unrolled --
        # K/V are already VMEM-resident (computed in-kernel from this step's x).
        m = jnp.full((n, T, 1), _MASK_VALUE, jnp.float32)
        l = jnp.zeros((n, T, 1), jnp.float32)
        acc = jnp.zeros((n, T, hs), jnp.float32)
        for j in range(n_kv):
            lo = j * kv_tile
            s = masked_scores(k3[:, lo:lo + kv_tile, :], lo, kv_tile)
            m_new = jnp.maximum(m, jnp.max(s, axis=-1, keepdims=True))
            alpha = jnp.exp(m - m_new)
            p = jnp.exp(s - m_new)
            l = alpha * l + jnp.sum(p, axis=-1, keepdims=True)
            acc = alpha * acc + jnp.einsum(
                "ntu,nud->ntd", p.astype(mxu_dtype), v3[:, lo:lo + kv_tile, :],
                preferred_element_type=jnp.float32)
            m = m_new

    # Deferred softmax normalization: one reciprocal-multiply on the EUP.
    y3 = acc * pl.reciprocal(l, approx=True)                            # (n, T, hs) f32

    # Output projection: batched per-head contraction + reduction over the
    # leading head axis ( == concat_h(y_h) @ Wproj ), replacing the serial
    # per-head accumulation chain.
    y4 = y3.reshape(H, rows, hs).astype(mxu_dtype)
    out = jnp.einsum("hrd,hdc->hrc", y4, wproj_ref[...].astype(mxu_dtype),
                     preferred_element_type=jnp.float32).sum(axis=0)    # (rows, C)
    o_ref[...] = out.astype(o_ref.dtype)


def _pick_batch_tile(B, T):
    """Batch elements folded into one grid step (grid = B // batch_tile).

    Prefer a SINGLE grid step: at small problems a second step is pure
    pipeline overhead (~0.35us/step) on single-TensorCore v5e/v6e and not
    enough work to feed v7x's second core.  Keep >=2 steps only when every
    step still gets >= 256 rows of real work.
    """
    candidates = [d for d in range(1, B + 1)
                  if B % d == 0 and ((d * T) % 8 == 0 or d == B)]
    multi = [d for d in candidates if (B // d) >= 2 and d * T >= 256]
    if multi:
        return min(multi)        # most parallel steps while keeping >=256 rows/step
    return B                     # whole batch in one step


def _pick_kv_tile(T):
    """KV-chunk length for the in-kernel online softmax (must divide T)."""
    if T <= 512:
        return T                 # single pass; O(T^2) scores still small
    for cand in (512, 256, 128, 64, 32, 16, 8):
        if T % cand == 0:
            return cand
    return T


def _vmem_limit_bytes(rows, C, H, T, kv_tile, x_bytes, w_bytes):
    """Explicit VMEM budget (v7x has 64 MiB total; scoped default is 32 MiB)."""
    hs = C // H
    n = H * (rows // T)
    io = 2 * 2 * rows * C * x_bytes              # x/out blocks, double-buffered
    w = 4 * C * C * w_bytes                      # (C,3C)+(C,C) weights, single-buffered
    interm = (rows * 3 * C * 4                   # fused qkv projection (f32)
              + 3 * n * T * hs * (4 + 2)         # q/k/v f32 + bf16 MXU copies
              + 2 * n * T * kv_tile * 4          # live score tile + exp(p)
              + n * T * hs * 4                   # online-softmax accumulator
              + 2 * n * T * 4                    # m / l statistics
              + rows * C * 4)                    # projected output (f32)
    est = io + w + interm
    return int(min(max(2 * est, 16 * 2 ** 20), 64 * 2 ** 20))


def self_attention(x, w_qkv, w_proj, *, num_heads, batch_tile=None, kv_tile=None,
                   mxu_dtype=jnp.bfloat16):
    """Causal multi-head self-attention (eval mode).

    x: (B, T, C); w_qkv: (C, 3C) == attention_weights.weight.T;
    w_proj: (C, C) == linear_projection.weight.T.  Returns (B, T, C).
    """
    B, T, C = x.shape
    H = num_heads
    if C % H:
        raise ValueError("embedding_dimension must be divisible by number_of_heads")
    hs = C // H

    if batch_tile is None:
        batch_tile = _pick_batch_tile(B, T)
    if B % batch_tile:
        raise ValueError("batch_tile must divide the batch size")
    if kv_tile is None:
        kv_tile = _pick_kv_tile(T)
    if T % kv_tile or (kv_tile % 8 and kv_tile != T):
        raise ValueError("kv_tile must divide T and be a sublane multiple")

    nb = B // batch_tile
    rows = batch_tile * T

    # Fold (B, T) into one row axis (free, contiguous reshape, done once).
    x2 = x.reshape(B * T, C)
    # Weights travel in bf16 (MXU-native operands; halves weight DMA + VMEM).
    # w_proj is pre-split per head on a *leading* axis: (C, C) -> (H, hs, C).
    wqkv = w_qkv.astype(mxu_dtype)
    wproj_heads = w_proj.reshape(H, hs, C).astype(mxu_dtype)

    kernel = functools.partial(_self_attention_kernel, num_heads=H, seq_len=T,
                               kv_tile=kv_tile, mxu_dtype=mxu_dtype)

    out2 = pl.pallas_call(
        kernel,
        out_shape=jax.ShapeDtypeStruct((B * T, C), x.dtype),
        grid_spec=pltpu.PrefetchScalarGridSpec(
            num_scalar_prefetch=0,
            grid=(nb,),
            in_specs=[
                pl.BlockSpec((rows, C), lambda i: (i, 0)),
                # Grid-invariant weights: single-buffered (no 2x VMEM copy).
                pl.BlockSpec((C, 3 * C), lambda i: (0, 0),
                             pipeline_mode=pl.Buffered(1)),
                pl.BlockSpec((H, hs, C), lambda i: (0, 0, 0),
                             pipeline_mode=pl.Buffered(1)),
            ],
            out_specs=pl.BlockSpec((rows, C), lambda i: (i, 0)),
        ),
        compiler_params=pltpu.CompilerParams(
            # batch-tile axis is embarrassingly parallel (v7x megacore);
            # explicit VMEM budget keeps tiling inside v7x's 64 MiB.
            dimension_semantics=("parallel",),
            vmem_limit_bytes=_vmem_limit_bytes(
                rows, C, H, T, kv_tile,
                x.dtype.itemsize, jnp.dtype(mxu_dtype).itemsize),
        ),
    )(x2, wqkv, wproj_heads)

    return out2.reshape(B, T, C)


def self_attention_ref(x, w_qkv, w_proj, *, num_heads):
    """Pure-JAX f32 reference mirroring the PyTorch forward (eval mode)."""
    B, T, C = x.shape
    hs = C // num_heads
    qkv = x.astype(jnp.float32) @ w_qkv.astype(jnp.float32)          # (B, T, 3C)
    q, k, v = jnp.split(qkv, 3, axis=-1)

    def heads(t):
        return t.reshape(B, T, num_heads, hs).transpose(0, 2, 1, 3)  # (B, H, T, hs)

    q, k, v = heads(q), heads(k), heads(v)
    att = (q @ jnp.swapaxes(k, -2, -1)) / math.sqrt(hs)              # (B, H, T, T)
    mask = jnp.tril(jnp.ones((T, T), dtype=bool))
    att = jnp.where(mask[None, None], att, -jnp.inf)
    att = jax.nn.softmax(att, axis=-1)
    y = att @ v                                                      # (B, H, T, hs)
    y = y.transpose(0, 2, 1, 3).reshape(B, T, C)
    return (y @ w_proj.astype(jnp.float32)).astype(x.dtype)


if __name__ == "__main__":
    def check(B, T, C, H, key, kv_tile=None):
        kx, kq, kp = jax.random.split(key, 3)
        x = jax.random.normal(kx, (B, T, C), dtype=jnp.float32)
        # nn.Linear weight init scale ~ 1/sqrt(in_features); deterministic here.
        w_qkv = jax.random.normal(kq, (C, 3 * C), dtype=jnp.float32) / math.sqrt(C)
        w_proj = jax.random.normal(kp, (C, C), dtype=jnp.float32) / math.sqrt(C)

        out = jax.block_until_ready(
            self_attention(x, w_qkv, w_proj, num_heads=H, kv_tile=kv_tile))
        ref = self_attention_ref(x, w_qkv, w_proj, num_heads=H)
        assert out.shape == (B, T, C)
        # bf16 MXU operands (f32 accumulation) vs an all-f32 reference ->
        # relaxed tolerance per review guidance; real bugs are O(1) errors.
        assert jnp.allclose(out, ref, atol=0.15, rtol=0.1), (
            "mismatch vs reference: max abs diff = %e"
            % float(jnp.max(jnp.abs(out - ref))))

    key = jax.random.PRNGKey(0)
    k1, k2, k3 = jax.random.split(key, 3)

    # Module hyperparameters: number_of_heads=4, embedding_dimension=32,
    # block_size=8, dropout_probability=0.0 (identity in eval mode).
    check(B=2, T=8, C=32, H=4, key=k1)                 # single-pass softmax, grid=(1,)
    check(B=2, T=64, C=32, H=4, key=k2, kv_tile=16)    # KV-chunked online softmax
    check(B=64, T=8, C=32, H=4, key=k3)                # multi-step "parallel" grid

    print("KERNEL_OK")
</pallas_src>

<mosaic_0001>
module attributes {stable_mosaic.version = 11 : i64} {
  func.func @_self_attention_kernel(%arg0: i32, %arg1: memref<16x32xf32, #tpu.memory_space<vmem>>, %arg2: memref<32x96xbf16, #tpu.memory_space<vmem>>, %arg3: memref<4x8x32xbf16, #tpu.memory_space<vmem>>, %arg4: memref<16x32xf32, #tpu.memory_space<vmem>>) attributes {dimension_semantics = [#tpu.dimension_semantics<parallel>], iteration_bounds = array<i64: 1>, scalar_prefetch = 0 : i64, scratch_operands = 0 : i64, tpu.core_type = #tpu.core_type<tc>, window_params = [{transform_indices = @transform_0, window_bounds = array<i64: 16, 32>}, {pipeline_mode = #tpu.pipeline_mode<synchronous>, transform_indices = @transform_1, window_bounds = array<i64: 32, 96>}, {pipeline_mode = #tpu.pipeline_mode<synchronous>, transform_indices = @transform_2, window_bounds = array<i64: 4, 8, 32>}, {transform_indices = @transform_3, window_bounds = array<i64: 16, 32>}]} {
    %c0 = arith.constant 0 : index
    %c0_0 = arith.constant 0 : index
    %0 = vector.load %arg1[%c0, %c0_0] : memref<16x32xf32, #tpu.memory_space<vmem>>, vector<16x32xf32>
    %1 = arith.truncf %0 : vector<16x32xf32> to vector<16x32xbf16>
    %c0_1 = arith.constant 0 : index
    %c0_2 = arith.constant 0 : index
    %2 = vector.load %arg2[%c0_1, %c0_2] : memref<32x96xbf16, #tpu.memory_space<vmem>>, vector<32x96xbf16>
    %cst = arith.constant dense<0.000000e+00> : vector<16x96xf32>
    %3 = tpu.matmul %1, %2, %cst {dimension_numbers = #tpu.dot_dimension_numbers<[1], [0], [0], [1], [0, 0, 1, 1], [], []>} : vector<16x32xbf16>, vector<32x96xbf16>, vector<16x96xf32> -> vector<16x96xf32>
    %4 = vector.extract_strided_slice %3 {offsets = [0, 0], sizes = [16, 32], strides = [1, 1]} : vector<16x96xf32> to vector<16x32xf32>
    %cst_3 = arith.constant 0.353553385 : f32
    %5 = vector.broadcast %cst_3 : f32 to vector<16x32xf32>
    %6 = arith.mulf %4, %5 : vector<16x32xf32>
    %7 = vector.extract_strided_slice %6 {offsets = [0, 0], sizes = [16, 8], strides = [1, 1]} : vector<16x32xf32> to vector<16x8xf32>
    %8 = vector.extract_strided_slice %6 {offsets = [0, 8], sizes = [16, 8], strides = [1, 1]} : vector<16x32xf32> to vector<16x8xf32>
    %9 = vector.extract_strided_slice %6 {offsets = [0, 16], sizes = [16, 8], strides = [1, 1]} : vector<16x32xf32> to vector<16x8xf32>
    %10 = vector.extract_strided_slice %6 {offsets = [0, 24], sizes = [16, 8], strides = [1, 1]} : vector<16x32xf32> to vector<16x8xf32>
    %11 = vector.shape_cast %7 : vector<16x8xf32> to vector<1x16x8xf32>
    %12 = vector.shape_cast %8 : vector<16x8xf32> to vector<1x16x8xf32>
    %13 = vector.shape_cast %9 : vector<16x8xf32> to vector<1x16x8xf32>
    %14 = vector.shape_cast %10 : vector<16x8xf32> to vector<1x16x8xf32>
    %15 = tpu.concatenate %11, %12, %13, %14 in 0 : vector<1x16x8xf32>, vector<1x16x8xf32>, vector<1x16x8xf32>, vector<1x16x8xf32> -> vector<4x16x8xf32>
    %16 = vector.shape_cast %15 : vector<4x16x8xf32> to vector<8x8x8xf32>
    %17 = arith.truncf %16 : vector<8x8x8xf32> to vector<8x8x8xbf16>
    %18 = vector.extract_strided_slice %3 {offsets = [0, 32], sizes = [16, 32], strides = [1, 1]} : vector<16x96xf32> to vector<16x32xf32>
    %19 = vector.extract_strided_slice %18 {offsets = [0, 0], sizes = [16, 8], strides = [1, 1]} : vector<16x32xf32> to vector<16x8xf32>
    %20 = vector.extract_strided_slice %18 {offsets = [0, 8], sizes = [16, 8], strides = [1, 1]} : vector<16x32xf32> to vector<16x8xf32>
    %21 = vector.extract_strided_slice %18 {offsets = [0, 16], sizes = [16, 8], strides = [1, 1]} : vector<16x32xf32> to vector<16x8xf32>
    %22 = vector.extract_strided_slice %18 {offsets = [0, 24], sizes = [16, 8], strides = [1, 1]} : vector<16x32xf32> to vector<16x8xf32>
    %23 = vector.shape_cast %19 : vector<16x8xf32> to vector<1x16x8xf32>
    %24 = vector.shape_cast %20 : vector<16x8xf32> to vector<1x16x8xf32>
    %25 = vector.shape_cast %21 : vector<16x8xf32> to vector<1x16x8xf32>
    %26 = vector.shape_cast %22 : vector<16x8xf32> to vector<1x16x8xf32>
    %27 = tpu.concatenate %23, %24, %25, %26 in 0 : vector<1x16x8xf32>, vector<1x16x8xf32>, vector<1x16x8xf32>, vector<1x16x8xf32> -> vector<4x16x8xf32>
    %28 = vector.shape_cast %27 : vector<4x16x8xf32> to vector<8x8x8xf32>
    %29 = arith.truncf %28 : vector<8x8x8xf32> to vector<8x8x8xbf16>
    %30 = vector.extract_strided_slice %3 {offsets = [0, 64], sizes = [16, 32], strides = [1, 1]} : vector<16x96xf32> to vector<16x32xf32>
    %31 = vector.extract_strided_slice %30 {offsets = [0, 0], sizes = [16, 8], strides = [1, 1]} : vector<16x32xf32> to vector<16x8xf32>
    %32 = vector.extract_strided_slice %30 {offsets = [0, 8], sizes = [16, 8], strides = [1, 1]} : vector<16x32xf32> to vector<16x8xf32>
    %33 = vector.extract_strided_slice %30 {offsets = [0, 16], sizes = [16, 8], strides = [1, 1]} : vector<16x32xf32> to vector<16x8xf32>
    %34 = vector.extract_strided_slice %30 {offsets = [0, 24], sizes = [16, 8], strides = [1, 1]} : vector<16x32xf32> to vector<16x8xf32>
    %35 = vector.shape_cast %31 : vector<16x8xf32> to vector<1x16x8xf32>
    %36 = vector.shape_cast %32 : vector<16x8xf32> to vector<1x16x8xf32>
    %37 = vector.shape_cast %33 : vector<16x8xf32> to vector<1x16x8xf32>
    %38 = vector.shape_cast %34 : vector<16x8xf32> to vector<1x16x8xf32>
    %39 = tpu.concatenate %35, %36, %37, %38 in 0 : vector<1x16x8xf32>, vector<1x16x8xf32>, vector<1x16x8xf32>, vector<1x16x8xf32> -> vector<4x16x8xf32>
    %40 = vector.shape_cast %39 : vector<4x16x8xf32> to vector<8x8x8xf32>
    %41 = arith.truncf %40 : vector<8x8x8xf32> to vector<8x8x8xbf16>
    %42 = tpu.iota {dimensions = array<i32: 0>} : vector<8x1xi32>
    "tpu.trace_start"() <{level = 10 : i32, message = "ntd,nud->ntu"}> : () -> ()
    %cst_4 = arith.constant dense<0.000000e+00> : vector<8x8x8xf32>
    %43 = tpu.matmul %17, %29, %cst_4 {dimension_numbers = #tpu.dot_dimension_numbers<[2], [2], [1], [1], [0, 0, 0, 1, 1, 1], [0], [0]>} : vector<8x8x8xbf16>, vector<8x8x8xbf16>, vector<8x8x8xf32> -> vector<8x8x8xf32>
    "tpu.trace_stop"() : () -> ()
    %44 = tpu.iota {dimensions = array<i32: 1>} : vector<8x8xi32>
    %c0_i32 = arith.constant 0 : i32
    %45 = vector.broadcast %c0_i32 : i32 to vector<8x8xi32>
    %46 = arith.addi %45, %44 : vector<8x8xi32>
    %47 = vector.broadcast %42 : vector<8x1xi32> to vector<8x8xi32>
    %48 = arith.cmpi sge, %47, %46 : vector<8x8xi32>
    %49 = vector.shape_cast %48 : vector<8x8xi1> to vector<1x8x8xi1>
    %cst_5 = arith.constant -1.000000e+30 : f32
    %50 = vector.shape_cast %49 : vector<1x8x8xi1> to vector<1x8x8xi1>
    %51 = vector.broadcast %50 : vector<1x8x8xi1> to vector<8x8x8xi1>
    %52 = vector.broadcast %cst_5 : f32 to vector<8x8x8xf32>
    %53 = arith.select %51, %43, %52 : vector<8x8x8xi1>, vector<8x8x8xf32>
    %cst_6 = arith.constant dense<0xFF800000> : vector<8x8xf32>
    %54 = vector.multi_reduction <maximumf>, %53, %cst_6 [2] : vector<8x8x8xf32> to vector<8x8xf32>
    %55 = vector.shape_cast %54 : vector<8x8xf32> to vector<8x8x1xf32>
    %56 = vector.broadcast %55 : vector<8x8x1xf32> to vector<8x8x8xf32>
    %57 = arith.subf %53, %56 : vector<8x8x8xf32>
    %58 = math.exp %57 : vector<8x8x8xf32>
    %cst_7 = arith.constant dense<0.000000e+00> : vector<8x8xf32>
    %59 = vector.multi_reduction <add>, %58, %cst_7 [2] : vector<8x8x8xf32> to vector<8x8xf32>
    %60 = vector.shape_cast %59 : vector<8x8xf32> to vector<8x8x1xf32>
    %61 = arith.truncf %58 : vector<8x8x8xf32> to vector<8x8x8xbf16>
    "tpu.trace_start"() <{level = 10 : i32, message = "ntu,nud->ntd"}> : () -> ()
    %cst_8 = arith.constant dense<0.000000e+00> : vector<8x8x8xf32>
    %62 = tpu.matmul %61, %41, %cst_8 {dimension_numbers = #tpu.dot_dimension_numbers<[2], [1], [1], [2], [0, 0, 0, 1, 1, 2], [0], [0]>} : vector<8x8x8xbf16>, vector<8x8x8xbf16>, vector<8x8x8xf32> -> vector<8x8x8xf32>
    "tpu.trace_stop"() : () -> ()
    %63 = tpu.reciprocal %60 {approx = true} : vector<8x8x1xf32> -> vector<8x8x1xf32>
    %64 = vector.broadcast %63 : vector<8x8x1xf32> to vector<8x8x8xf32>
    %65 = arith.mulf %62, %64 : vector<8x8x8xf32>
    %66 = vector.shape_cast %65 : vector<8x8x8xf32> to vector<4x16x8xf32>
    %67 = arith.truncf %66 : vector<4x16x8xf32> to vector<4x16x8xbf16>
    %c0_9 = arith.constant 0 : index
    %c0_10 = arith.constant 0 : index
    %c0_11 = arith.constant 0 : index
    %68 = vector.load %arg3[%c0_9, %c0_10, %c0_11] : memref<4x8x32xbf16, #tpu.memory_space<vmem>>, vector<4x8x32xbf16>
    "tpu.trace_start"() <{level = 10 : i32, message = "hrd,hdc->hrc"}> : () -> ()
    %cst_12 = arith.constant dense<0.000000e+00> : vector<4x16x32xf32>
    %69 = tpu.matmul %67, %68, %cst_12 {dimension_numbers = #tpu.dot_dimension_numbers<[2], [1], [1], [2], [0, 0, 0, 1, 1, 2], [0], [0]>} : vector<4x16x8xbf16>, vector<4x8x32xbf16>, vector<4x16x32xf32> -> vector<4x16x32xf32>
    "tpu.trace_stop"() : () -> ()
    %cst_13 = arith.constant dense<0.000000e+00> : vector<16x32xf32>
    %70 = vector.multi_reduction <add>, %69, %cst_13 [0] : vector<4x16x32xf32> to vector<16x32xf32>
    %c0_14 = arith.constant 0 : index
    %c0_15 = arith.constant 0 : index
    %71 = vector.load %arg4[%c0_14, %c0_15] : memref<16x32xf32, #tpu.memory_space<vmem>>, vector<16x32xf32>
    tpu.vector_store %arg4[%c0_14, %c0_15], %70 {strides = array<i32>} : memref<16x32xf32, #tpu.memory_space<vmem>>, vector<16x32xf32>,
    return
  }
  func.func @transform_0(%arg0: i32) -> (i32, i32) {
    %c0_i32 = arith.constant 0 : i32
    %c0_i32_0 = arith.constant 0 : i32
    return %arg0, %c0_i32 : i32, i32
  }
  func.func @transform_1(%arg0: i32) -> (i32, i32) {
    %c0_i32 = arith.constant 0 : i32
    %c0_i32_0 = arith.constant 0 : i32
    %c0_i32_1 = arith.constant 0 : i32
    return %c0_i32, %c0_i32_0 : i32, i32
  }
  func.func @transform_2(%arg0: i32) -> (i32, i32, i32) {
    %c0_i32 = arith.constant 0 : i32
    %c0_i32_0 = arith.constant 0 : i32
    %c0_i32_1 = arith.constant 0 : i32
    %c0_i32_2 = arith.constant 0 : i32
    return %c0_i32, %c0_i32_0, %c0_i32_1 : i32, i32, i32
  }
  func.func @transform_3(%arg0: i32) -> (i32, i32) {
    %c0_i32 = arith.constant 0 : i32
    %c0_i32_0 = arith.constant 0 : i32
    return %arg0, %c0_i32 : i32, i32
  }
}

</mosaic_0001>

<llo_original>
// kernel: tpu_custom_call.1
$region0: #{tpu_custom_call.1}
  #allocation0 [shape = 'u32[]', space=smem, size = 0x4, offset = 0x4, fixed_abs, tag = 'smem constant byte address 0x4 - core index']
  #allocation1 [shape = 'u32[144,128]{1,0:T(1,128)}', space=vmem, size = 0x12000, scoped, tag = 'internal scratch']
  %s0 = inlined_call_operand.hbm [shape: f32[16,32], index: 0, kind: input, shape index: {}]
  %s1 = inlined_call_operand.hbm [shape: bf16[32,96], index: 1, kind: input, shape index: {}]
  %s2 = inlined_call_operand.hbm [shape: bf16[4,8,32], index: 2, kind: input, shape index: {}]
  %s3 = inlined_call_operand.hbm [shape: f32[16,32], index: 3, kind: output, shape index: {}]
  %s4 = sld [smem:[#allocation0]]
  $region34: #{tpu_custom_call.1} parent=0
    _
  %s6 = ssub.s32 1, %s4
  %s7 = scalar_select 0, %s6, %s4
  $region1: #{tpu_custom_call.1} parent=0
    #allocation2 [shape = 'u8[8192]{0}', space=vmem, size = 0x2000, scoped, tag = 'input window, operand 0, single buffered']
    #allocation3 [shape = 's32[1]{0}', space=sflag, size = 0x4, scoped, tag = 'scoped memory for tpu_custom_call.1']
    #allocation4 [shape = 's32[1]{0}', space=sflag, size = 0x4, scoped, tag = 'scoped memory for tpu_custom_call.1']
    #allocation5 [shape = 'u8[8192]{0}', space=vmem, size = 0x2000, scoped, tag = 'input window, operand 1, single buffered']
    #allocation6 [shape = 's32[1]{0}', space=sflag, size = 0x4, scoped, tag = 'scoped memory for tpu_custom_call.1']
    #allocation7 [shape = 'u8[8192]{0}', space=vmem, size = 0x2000, scoped, tag = 'input window, operand 2, single buffered']
    #allocation8 [shape = 'u8[8192]{0}', space=vmem, size = 0x2000, scoped, tag = 'output window, operand 0, single buffered']
    %8 = vsyncpa [#allocation3], 0
    %9 = vsyncpa [#allocation6], 0
    %10 = vsyncpa [#allocation4], 0
    // Predicated region
    $region2: #{tpu_custom_call.1} parent=1 // pred_check
      _
    $region3: #{tpu_custom_call.1} parent=1 // pred_check_branch
      %12 = sbr.rel (0) target = $region5
    $region4: #{tpu_custom_call.1} parent=1 // pred_region
      %s14 = ssub.s32 256, 256
      %15 = vsyncadd [#allocation3], %s14
      %s16 = sshll.u32 [#allocation2], 4
      %s17 = int_to_ptr.vmem [resolvable:$true] %s16
      %22 = dma.hbm_to_vmem [thread:$0]  %s0, 256, %s17, [#allocation3], 128, 128, 8
    $region5: #{tpu_custom_call.1} parent=1 // pred_fallthru
      _
    // Predicated region
    $region6: #{tpu_custom_call.1} parent=1 // pred_check
      _
    $region7: #{tpu_custom_call.1} parent=1 // pred_check_branch
      %24 = sbr.rel (0) target = $region9
    $region8: #{tpu_custom_call.1} parent=1 // pred_region
      %s26 = ssub.s32 256, 256
      %27 = vsyncadd [#allocation6], %s26
      %s28 = sshll.u32 [#allocation5], 4
      %s29 = int_to_ptr.vmem [resolvable:$true] %s28
      %34 = dma.hbm_to_vmem [thread:$0]  %s1, 256, %s29, [#allocation6], 64, 64, 4
    $region9: #{tpu_custom_call.1} parent=1 // pred_fallthru
      _
    // Predicated region
    $region10: #{tpu_custom_call.1} parent=1 // pred_check
      _
    $region11: #{tpu_custom_call.1} parent=1 // pred_check_branch
      %36 = sbr.rel (0) target = $region13
    $region12: #{tpu_custom_call.1} parent=1 // pred_region
      %s38 = ssub.s32 256, 256
      %39 = vsyncadd [#allocation6], %s38
      %s40 = sshll.u32 [#allocation7], 4
      %s41 = int_to_ptr.vmem [resolvable:$true] %s40
      %46 = dma.hbm_to_vmem [thread:$0]  %s2, 256, %s41, [#allocation6], 64, 64, 4
    $region13: #{tpu_custom_call.1} parent=1 // pred_fallthru
      _
    // Predicated region
    $region14: #{tpu_custom_call.1} parent=1 // pred_check
      _
    $region15: #{tpu_custom_call.1} parent=1 // pred_check_branch
      %48 = sbr.rel (0) target = $region17
    $region16: #{tpu_custom_call.1} parent=1 // pred_region
      %49 = dma.done [#allocation3], 256
    $region17: #{tpu_custom_call.1} parent=1 // pred_fallthru
      _
    // Predicated region
    $region18: #{tpu_custom_call.1} parent=1 // pred_check
      _
    $region19: #{tpu_custom_call.1} parent=1 // pred_check_branch
      %51 = sbr.rel (0) target = $region21
    $region20: #{tpu_custom_call.1} parent=1 // pred_region
      %52 = dma.done [#allocation6], 256
    $region21: #{tpu_custom_call.1} parent=1 // pred_fallthru
      _
    // Predicated region
    $region22: #{tpu_custom_call.1} parent=1 // pred_check
      _
    $region23: #{tpu_custom_call.1} parent=1 // pred_check_branch
      %54 = sbr.rel (0) target = $region25
    $region24: #{tpu_custom_call.1} parent=1 // pred_region
      %55 = dma.done [#allocation6], 256
    $region25: #{tpu_custom_call.1} parent=1 // pred_fallthru
      _
    %v57 = vld [vmem:[#allocation2] sm:$0xff]
    %v58 = vld [vmem:[#allocation2 + $0x8] sm:$0xff]
    %v59 = vpack.c.bf16 %v58, %v57
    %v60 = vld [vmem:[#allocation5] sm:$0xf]
    %v61 = vld [vmem:[#allocation5 + $0x4] sm:$0xf]
    %v62 = vld [vmem:[#allocation5 + $0x8] sm:$0xf]
    %v63 = vld [vmem:[#allocation5 + $0xc] sm:$0xf]
    %v68 = vunpack.c.l.b16 %v60
    %v69 = vunpack.c.l.b16 %v61
    %v70 = vunpack.c.l.b16 %v62
    %v71 = vunpack.c.l.b16 %v63
    %v72 = vpack.c.b16 %v69, %v68
    %v73 = vpack.c.b16 %v71, %v70
    %vm76 = vcmask 261120
    %v78 = vsel %vm76, %v59, 0
    %80 = vmatprep.subr.bf16.mxu0 0
    %81 = vmatpush1.bf16.msra.mxu0 0
    %82 = vmatprep.subr.bf16.mxu0 0
    %83 = vmatpush1.bf16.msra.mxu0 0
    %84 = vmatprep.subr.bf16.mxu0 0
    %85 = vmatpush1.bf16.msra.mxu0 0
    %86 = vmatprep.subr.bf16.mxu0 0
    %87 = vmatpush1.bf16.msra.mxu0 0
    %88 = vmatprep.subr.bf16.mxu0 0
    %89 = vmatpush1.bf16.msra.mxu0 0
    %90 = vmatprep.subr.bf16.mxu0 0
    %91 = vmatpush1.bf16.msra.mxu0 0
    %92 = vmatprep.subr.bf16.mxu0 0
    %93 = vmatpush1.bf16.msra.mxu0 %v73
    %94 = vmatprep.subr.bf16.mxu0 0
    %95 = vmatpush1.bf16.msra.mxu0 %v72
    %96 = vmatprep.subr.bf16.mxu0 0
    %97 = vmatpush2.bf16.msra.mxu0 0
    %98 = vmatprep.subr.bf16.mxu0 0
    %99 = vmatpush2.bf16.msra.mxu0 0
    %100 = vmatprep.subr.bf16.mxu0 0
    %101 = vmatpush2.bf16.msra.mxu0 0
    %102 = vmatprep.subr.bf16.mxu0 0
    %103 = vmatpush2.bf16.msra.mxu0 0
    %104 = vmatprep.subr.bf16.mxu0 0
    %105 = vmatpush2.bf16.msra.mxu0 0
    %106 = vmatprep.subr.bf16.mxu0 0
    %107 = vmatpush2.bf16.msra.mxu0 0
    %108 = vmatprep.subr.bf16.mxu0 0
    %109 = vmatpush2.bf16.msra.mxu0 0
    %110 = vmatprep.subr.bf16.mxu0 0
    %111 = vmatpush2.bf16.msra.mxu0 0
    %112 = vmatprep.mubr.bf16.mxu0 0
    %113 = vmatmul.mubr.bf16.gmra.mxu0 %v78
    %v114 = vpop.f32.mrf.mxu0
    %v115 = vadd.f32 0.0, %v114
    %v116 = vpop.f32.mrf.mxu0
    %v117 = vpop.f32.mrf.mxu0
    %v118 = vadd.f32 0.0, %v117
    %v119 = vpop.f32.mrf.mxu0
    %120 = vdwg.mxu0
    %v121 = vmul.f32 %v115, 0.35355338
    %v122 = vmul.f32 %v118, 0.35355338
    %125 = vrot.lane.b32.xlu0 %v121, 120
    %v126 = vpop.permute.xlu0 %125
    %127 = vrot.lane.b32.xlu0 %v122, 120
    %v128 = vpop.permute.xlu0 %127
    %131 = vrot.lane.b32.xlu0 %v121, 112
    %v132 = vpop.permute.xlu0 %131
    %133 = vrot.lane.b32.xlu0 %v122, 112
    %v134 = vpop.permute.xlu0 %133
    %137 = vrot.lane.b32.xlu0 %v121, 104
    %v138 = vpop.permute.xlu0 %137
    %139 = vrot.lane.b32.xlu0 %v122, 104
    %v140 = vpop.permute.xlu0 %139
    %v143 = vpack.c.bf16 %v121, %v121
    %v144 = vpack.c.bf16 %v122, %v122
    %v145 = vpack.c.bf16 %v126, %v126
    %v146 = vpack.c.bf16 %v128, %v128
    %v147 = vpack.c.bf16 %v132, %v132
    %v148 = vpack.c.bf16 %v134, %v134
    %v149 = vpack.c.bf16 %v138, %v138
    %v150 = vpack.c.bf16 %v140, %v140
    %153 = vrot.lane.b32.xlu0 %v115, 120
    %v154 = vpop.permute.xlu0 %153
    %155 = vrot.lane.b32.xlu0 %v118, 120
    %v156 = vpop.permute.xlu0 %155
    %159 = vrot.lane.b32.xlu0 %v115, 112
    %v160 = vpop.permute.xlu0 %159
    %161 = vrot.lane.b32.xlu0 %v118, 112
    %v162 = vpop.permute.xlu0 %161
    %165 = vrot.lane.b32.xlu0 %v115, 104
    %v166 = vpop.permute.xlu0 %165
    %167 = vrot.lane.b32.xlu0 %v118, 104
    %v168 = vpop.permute.xlu0 %167
    %v171 = vpack.c.bf16 %v115, %v115
    %v172 = vpack.c.bf16 %v118, %v118
    %v173 = vpack.c.bf16 %v154, %v154
    %v174 = vpack.c.bf16 %v156, %v156
    %v175 = vpack.c.bf16 %v160, %v160
    %v176 = vpack.c.bf16 %v162, %v162
    %v177 = vpack.c.bf16 %v166, %v166
    %v178 = vpack.c.bf16 %v168, %v168
    %v179 = vlaneseq
    %v180 = vshrl.u32 %v179, 7
    %182 = vrot.lane.b32.xlu0 %v171, 96
    %v183 = vpop.permute.xlu0 %182
    %vm184 = vcmask 64512
    %v186 = vsel %vm184, %v143, 0
    %v189 = vsel %vm184, %v183, 0
    %191 = vmatprep.subr.bf16.mxu0 0
    %192 = vmatpush1.bf16.xpose.msra.mxu0 0
    %193 = vmatprep.subr.bf16.mxu0 0
    %194 = vmatpush1.bf16.xpose.msra.mxu0 0
    %195 = vmatprep.subr.bf16.mxu0 0
    %196 = vmatpush1.bf16.xpose.msra.mxu0 0
    %197 = vmatprep.subr.bf16.mxu0 0
    %198 = vmatpush1.bf16.xpose.msra.mxu0 0
    %199 = vmatprep.subr.bf16.mxu0 0
    %200 = vmatpush1.bf16.xpose.msra.mxu0 0
    %201 = vmatprep.subr.bf16.mxu0 0
    %202 = vmatpush1.bf16.xpose.msra.mxu0 0
    %203 = vmatprep.subr.bf16.mxu0 0
    %204 = vmatpush1.bf16.xpose.msra.mxu0 0
    %205 = vmatprep.subr.bf16.mxu0 0
    %206 = vmatpush1.bf16.xpose.msra.mxu0 %v189
    %207 = vmatprep.subr.bf16.mxu0 0
    %208 = vmatpush2.bf16.xpose.msra.mxu0 0
    %209 = vmatprep.subr.bf16.mxu0 0
    %210 = vmatpush2.bf16.xpose.msra.mxu0 0
    %211 = vmatprep.subr.bf16.mxu0 0
    %212 = vmatpush2.bf16.xpose.msra.mxu0 0
    %213 = vmatprep.subr.bf16.mxu0 0
    %214 = vmatpush2.bf16.xpose.msra.mxu0 0
    %215 = vmatprep.subr.bf16.mxu0 0
    %216 = vmatpush2.bf16.xpose.msra.mxu0 0
    %217 = vmatprep.subr.bf16.mxu0 0
    %218 = vmatpush2.bf16.xpose.msra.mxu0 0
    %219 = vmatprep.subr.bf16.mxu0 0
    %220 = vmatpush2.bf16.xpose.msra.mxu0 0
    %221 = vmatprep.subr.bf16.mxu0 0
    %222 = vmatpush2.bf16.xpose.msra.mxu0 0
    %223 = vmatprep.mubr.bf16.mxu0 0
    %224 = vmatmul.mubr.bf16.gmra.mxu0 %v186
    %v225 = vpop.f32.mrf.mxu0
    %v226 = vadd.f32 0.0, %v225
    %v227 = vpop.f32.mrf.mxu0
    %v228 = vpop.f32.mrf.mxu0
    %v229 = vpop.f32.mrf.mxu0
    %230 = vdwg.mxu0
    %232 = vrot.lane.b32.xlu0 %v172, 96
    %v233 = vpop.permute.xlu0 %232
    %v235 = vsel %vm184, %v144, 0
    %v238 = vsel %vm184, %v233, 0
    %240 = vmatprep.subr.bf16.mxu0 0
    %241 = vmatpush1.bf16.xpose.msra.mxu0 0
    %242 = vmatprep.subr.bf16.mxu0 0
    %243 = vmatpush1.bf16.xpose.msra.mxu0 0
    %244 = vmatprep.subr.bf16.mxu0 0
    %245 = vmatpush1.bf16.xpose.msra.mxu0 0
    %246 = vmatprep.subr.bf16.mxu0 0
    %247 = vmatpush1.bf16.xpose.msra.mxu0 0
    %248 = vmatprep.subr.bf16.mxu0 0
    %249 = vmatpush1.bf16.xpose.msra.mxu0 0
    %250 = vmatprep.subr.bf16.mxu0 0
    %251 = vmatpush1.bf16.xpose.msra.mxu0 0
    %252 = vmatprep.subr.bf16.mxu0 0
    %253 = vmatpush1.bf16.xpose.msra.mxu0 0
    %254 = vmatprep.subr.bf16.mxu0 0
    %255 = vmatpush1.bf16.xpose.msra.mxu0 %v238
    %256 = vmatprep.subr.bf16.mxu0 0
    %257 = vmatpush2.bf16.xpose.msra.mxu0 0
    %258 = vmatprep.subr.bf16.mxu0 0
    %259 = vmatpush2.bf16.xpose.msra.mxu0 0
    %260 = vmatprep.subr.bf16.mxu0 0
    %261 = vmatpush2.bf16.xpose.msra.mxu0 0
    %262 = vmatprep.subr.bf16.mxu0 0
    %263 = vmatpush2.bf16.xpose.msra.mxu0 0
    %264 = vmatprep.subr.bf16.mxu0 0
    %265 = vmatpush2.bf16.xpose.msra.mxu0 0
    %266 = vmatprep.subr.bf16.mxu0 0
    %267 = vmatpush2.bf16.xpose.msra.mxu0 0
    %268 = vmatprep.subr.bf16.mxu0 0
    %269 = vmatpush2.bf16.xpose.msra.mxu0 0
    %270 = vmatprep.subr.bf16.mxu0 0
    %271 = vmatpush2.bf16.xpose.msra.mxu0 0
    %272 = vmatprep.mubr.bf16.mxu0 0
    %273 = vmatmul.mubr.bf16.gmra.mxu0 %v235
    %v274 = vpop.f32.mrf.mxu0
    %v275 = vadd.f32 0.0, %v274
    %v276 = vpop.f32.mrf.mxu0
    %v277 = vpop.f32.mrf.mxu0
    %v278 = vpop.f32.mrf.mxu0
    %279 = vdwg.mxu0
    %281 = vrot.lane.b32.xlu0 %v173, 96
    %v282 = vpop.permute.xlu0 %281
    %v284 = vsel %vm184, %v145, 0
    %v287 = vsel %vm184, %v282, 0
    %289 = vmatprep.subr.bf16.mxu0 0
    %290 = vmatpush1.bf16.xpose.msra.mxu0 0
    %291 = vmatprep.subr.bf16.mxu0 0
    %292 = vmatpush1.bf16.xpose.msra.mxu0 0
    %293 = vmatprep.subr.bf16.mxu0 0
    %294 = vmatpush1.bf16.xpose.msra.mxu0 0
    %295 = vmatprep.subr.bf16.mxu0 0
    %296 = vmatpush1.bf16.xpose.msra.mxu0 0
    %297 = vmatprep.subr.bf16.mxu0 0
    %298 = vmatpush1.bf16.xpose.msra.mxu0 0
    %299 = vmatprep.subr.bf16.mxu0 0
    %300 = vmatpush1.bf16.xpose.msra.mxu0 0
    %301 = vmatprep.subr.bf16.mxu0 0
    %302 = vmatpush1.bf16.xpose.msra.mxu0 0
    %303 = vmatprep.subr.bf16.mxu0 0
    %304 = vmatpush1.bf16.xpose.msra.mxu0 %v287
    %305 = vmatprep.subr.bf16.mxu0 0
    %306 = vmatpush2.bf16.xpose.msra.mxu0 0
    %307 = vmatprep.subr.bf16.mxu0 0
    %308 = vmatpush2.bf16.xpose.msra.mxu0 0
    %309 = vmatprep.subr.bf16.mxu0 0
    %310 = vmatpush2.bf16.xpose.msra.mxu0 0
    %311 = vmatprep.subr.bf16.mxu0 0
    %312 = vmatpush2.bf16.xpose.msra.mxu0 0
    %313 = vmatprep.subr.bf16.mxu0 0
    %314 = vmatpush2.bf16.xpose.msra.mxu0 0
    %315 = vmatprep.subr.bf16.mxu0 0
    %316 = vmatpush2.bf16.xpose.msra.mxu0 0
    %317 = vmatprep.subr.bf16.mxu0 0
    %318 = vmatpush2.bf16.xpose.msra.mxu0 0
    %319 = vmatprep.subr.bf16.mxu0 0
    %320 = vmatpush2.bf16.xpose.msra.mxu0 0
    %321 = vmatprep.mubr.bf16.mxu0 0
    %322 = vmatmul.mubr.bf16.gmra.mxu0 %v284
    %v323 = vpop.f32.mrf.mxu0
    %v324 = vadd.f32 0.0, %v323
    %v325 = vpop.f32.mrf.mxu0
    %v326 = vpop.f32.mrf.mxu0
    %v327 = vpop.f32.mrf.mxu0
    %328 = vdwg.mxu0
    %330 = vrot.lane.b32.xlu0 %v174, 96
    %v331 = vpop.permute.xlu0 %330
    %v333 = vsel %vm184, %v146, 0
    %v336 = vsel %vm184, %v331, 0
    %338 = vmatprep.subr.bf16.mxu0 0
    %339 = vmatpush1.bf16.xpose.msra.mxu0 0
    %340 = vmatprep.subr.bf16.mxu0 0
    %341 = vmatpush1.bf16.xpose.msra.mxu0 0
    %342 = vmatprep.subr.bf16.mxu0 0
    %343 = vmatpush1.bf16.xpose.msra.mxu0 0
    %344 = vmatprep.subr.bf16.mxu0 0
    %345 = vmatpush1.bf16.xpose.msra.mxu0 0
    %346 = vmatprep.subr.bf16.mxu0 0
    %347 = vmatpush1.bf16.xpose.msra.mxu0 0
    %348 = vmatprep.subr.bf16.mxu0 0
    %349 = vmatpush1.bf16.xpose.msra.mxu0 0
    %350 = vmatprep.subr.bf16.mxu0 0
    %351 = vmatpush1.bf16.xpose.msra.mxu0 0
    %352 = vmatprep.subr.bf16.mxu0 0
    %353 = vmatpush1.bf16.xpose.msra.mxu0 %v336
    %354 = vmatprep.subr.bf16.mxu0 0
    %355 = vmatpush2.bf16.xpose.msra.mxu0 0
    %356 = vmatprep.subr.bf16.mxu0 0
    %357 = vmatpush2.bf16.xpose.msra.mxu0 0
    %358 = vmatprep.subr.bf16.mxu0 0
    %359 = vmatpush2.bf16.xpose.msra.mxu0 0
    %360 = vmatprep.subr.bf16.mxu0 0
    %361 = vmatpush2.bf16.xpose.msra.mxu0 0
    %362 = vmatprep.subr.bf16.mxu0 0
    %363 = vmatpush2.bf16.xpose.msra.mxu0 0
    %364 = vmatprep.subr.bf16.mxu0 0
    %365 = vmatpush2.bf16.xpose.msra.mxu0 0
    %366 = vmatprep.subr.bf16.mxu0 0
    %367 = vmatpush2.bf16.xpose.msra.mxu0 0
    %368 = vmatprep.subr.bf16.mxu0 0
    %369 = vmatpush2.bf16.xpose.msra.mxu0 0
    %370 = vmatprep.mubr.bf16.mxu0 0
    %371 = vmatmul.mubr.bf16.gmra.mxu0 %v333
    %v372 = vpop.f32.mrf.mxu0
    %v373 = vadd.f32 0.0, %v372
    %v374 = vpop.f32.mrf.mxu0
    %v375 = vpop.f32.mrf.mxu0
    %v376 = vpop.f32.mrf.mxu0
    %377 = vdwg.mxu0
    %379 = vrot.lane.b32.xlu0 %v175, 96
    %v380 = vpop.permute.xlu0 %379
    %v382 = vsel %vm184, %v147, 0
    %v385 = vsel %vm184, %v380, 0
    %387 = vmatprep.subr.bf16.mxu0 0
    %388 = vmatpush1.bf16.xpose.msra.mxu0 0
    %389 = vmatprep.subr.bf16.mxu0 0
    %390 = vmatpush1.bf16.xpose.msra.mxu0 0
    %391 = vmatprep.subr.bf16.mxu0 0
    %392 = vmatpush1.bf16.xpose.msra.mxu0 0
    %393 = vmatprep.subr.bf16.mxu0 0
    %394 = vmatpush1.bf16.xpose.msra.mxu0 0
    %395 = vmatprep.subr.bf16.mxu0 0
    %396 = vmatpush1.bf16.xpose.msra.mxu0 0
    %397 = vmatprep.subr.bf16.mxu0 0
    %398 = vmatpush1.bf16.xpose.msra.mxu0 0
    %399 = vmatprep.subr.bf16.mxu0 0
    %400 = vmatpush1.bf16.xpose.msra.mxu0 0
    %401 = vmatprep.subr.bf16.mxu0 0
    %402 = vmatpush1.bf16.xpose.msra.mxu0 %v385
    %403 = vmatprep.subr.bf16.mxu0 0
    %404 = vmatpush2.bf16.xpose.msra.mxu0 0
    %405 = vmatprep.subr.bf16.mxu0 0
    %406 = vmatpush2.bf16.xpose.msra.mxu0 0
    %407 = vmatprep.subr.bf16.mxu0 0
    %408 = vmatpush2.bf16.xpose.msra.mxu0 0
    %409 = vmatprep.subr.bf16.mxu0 0
    %410 = vmatpush2.bf16.xpose.msra.mxu0 0
    %411 = vmatprep.subr.bf16.mxu0 0
    %412 = vmatpush2.bf16.xpose.msra.mxu0 0
    %413 = vmatprep.subr.bf16.mxu0 0
    %414 = vmatpush2.bf16.xpose.msra.mxu0 0
    %415 = vmatprep.subr.bf16.mxu0 0
    %416 = vmatpush2.bf16.xpose.msra.mxu0 0
    %417 = vmatprep.subr.bf16.mxu0 0
    %418 = vmatpush2.bf16.xpose.msra.mxu0 0
    %419 = vmatprep.mubr.bf16.mxu0 0
    %420 = vmatmul.mubr.bf16.gmra.mxu0 %v382
    %v421 = vpop.f32.mrf.mxu0
    %v422 = vadd.f32 0.0, %v421
    %v423 = vpop.f32.mrf.mxu0
    %v424 = vpop.f32.mrf.mxu0
    %v425 = vpop.f32.mrf.mxu0
    %426 = vdwg.mxu0
    %428 = vrot.lane.b32.xlu0 %v176, 96
    %v429 = vpop.permute.xlu0 %428
    %v431 = vsel %vm184, %v148, 0
    %v434 = vsel %vm184, %v429, 0
    %436 = vmatprep.subr.bf16.mxu0 0
    %437 = vmatpush1.bf16.xpose.msra.mxu0 0
    %438 = vmatprep.subr.bf16.mxu0 0
    %439 = vmatpush1.bf16.xpose.msra.mxu0 0
    %440 = vmatprep.subr.bf16.mxu0 0
    %441 = vmatpush1.bf16.xpose.msra.mxu0 0
    %442 = vmatprep.subr.bf16.mxu0 0
    %443 = vmatpush1.bf16.xpose.msra.mxu0 0
    %444 = vmatprep.subr.bf16.mxu0 0
    %445 = vmatpush1.bf16.xpose.msra.mxu0 0
    %446 = vmatprep.subr.bf16.mxu0 0
    %447 = vmatpush1.bf16.xpose.msra.mxu0 0
    %448 = vmatprep.subr.bf16.mxu0 0
    %449 = vmatpush1.bf16.xpose.msra.mxu0 0
    %450 = vmatprep.subr.bf16.mxu0 0
    %451 = vmatpush1.bf16.xpose.msra.mxu0 %v434
    %452 = vmatprep.subr.bf16.mxu0 0
    %453 = vmatpush2.bf16.xpose.msra.mxu0 0
    %454 = vmatprep.subr.bf16.mxu0 0
    %455 = vmatpush2.bf16.xpose.msra.mxu0 0
    %456 = vmatprep.subr.bf16.mxu0 0
    %457 = vmatpush2.bf16.xpose.msra.mxu0 0
    %458 = vmatprep.subr.bf16.mxu0 0
    %459 = vmatpush2.bf16.xpose.msra.mxu0 0
    %460 = vmatprep.subr.bf16.mxu0 0
    %461 = vmatpush2.bf16.xpose.msra.mxu0 0
    %462 = vmatprep.subr.bf16.mxu0 0
    %463 = vmatpush2.bf16.xpose.msra.mxu0 0
    %464 = vmatprep.subr.bf16.mxu0 0
    %465 = vmatpush2.bf16.xpose.msra.mxu0 0
    %466 = vmatprep.subr.bf16.mxu0 0
    %467 = vmatpush2.bf16.xpose.msra.mxu0 0
    %468 = vmatprep.mubr.bf16.mxu0 0
    %469 = vmatmul.mubr.bf16.gmra.mxu0 %v431
    %v470 = vpop.f32.mrf.mxu0
    %v471 = vadd.f32 0.0, %v470
    %v472 = vpop.f32.mrf.mxu0
    %v473 = vpop.f32.mrf.mxu0
    %v474 = vpop.f32.mrf.mxu0
    %475 = vdwg.mxu0
    %477 = vrot.lane.b32.xlu0 %v177, 96
    %v478 = vpop.permute.xlu0 %477
    %v480 = vsel %vm184, %v149, 0
    %v483 = vsel %vm184, %v478, 0
    %485 = vmatprep.subr.bf16.mxu0 0
    %486 = vmatpush1.bf16.xpose.msra.mxu0 0
    %487 = vmatprep.subr.bf16.mxu0 0
    %488 = vmatpush1.bf16.xpose.msra.mxu0 0
    %489 = vmatprep.subr.bf16.mxu0 0
    %490 = vmatpush1.bf16.xpose.msra.mxu0 0
    %491 = vmatprep.subr.bf16.mxu0 0
    %492 = vmatpush1.bf16.xpose.msra.mxu0 0
    %493 = vmatprep.subr.bf16.mxu0 0
    %494 = vmatpush1.bf16.xpose.msra.mxu0 0
    %495 = vmatprep.subr.bf16.mxu0 0
    %496 = vmatpush1.bf16.xpose.msra.mxu0 0
    %497 = vmatprep.subr.bf16.mxu0 0
    %498 = vmatpush1.bf16.xpose.msra.mxu0 0
    %499 = vmatprep.subr.bf16.mxu0 0
    %500 = vmatpush1.bf16.xpose.msra.mxu0 %v483
    %501 = vmatprep.subr.bf16.mxu0 0
    %502 = vmatpush2.bf16.xpose.msra.mxu0 0
    %503 = vmatprep.subr.bf16.mxu0 0
    %504 = vmatpush2.bf16.xpose.msra.mxu0 0
    %505 = vmatprep.subr.bf16.mxu0 0
    %506 = vmatpush2.bf16.xpose.msra.mxu0 0
    %507 = vmatprep.subr.bf16.mxu0 0
    %508 = vmatpush2.bf16.xpose.msra.mxu0 0
    %509 = vmatprep.subr.bf16.mxu0 0
    %510 = vmatpush2.bf16.xpose.msra.mxu0 0
    %511 = vmatprep.subr.bf16.mxu0 0
    %512 = vmatpush2.bf16.xpose.msra.mxu0 0
    %513 = vmatprep.subr.bf16.mxu0 0
    %514 = vmatpush2.bf16.xpose.msra.mxu0 0
    %515 = vmatprep.subr.bf16.mxu0 0
    %516 = vmatpush2.bf16.xpose.msra.mxu0 0
    %517 = vmatprep.mubr.bf16.mxu0 0
    %518 = vmatmul.mubr.bf16.gmra.mxu0 %v480
    %v519 = vpop.f32.mrf.mxu0
    %v520 = vadd.f32 0.0, %v519
    %v521 = vpop.f32.mrf.mxu0
    %v522 = vpop.f32.mrf.mxu0
    %v523 = vpop.f32.mrf.mxu0
    %524 = vdwg.mxu0
    %526 = vrot.lane.b32.xlu0 %v178, 96
    %v527 = vpop.permute.xlu0 %526
    %v529 = vsel %vm184, %v150, 0
    %v532 = vsel %vm184, %v527, 0
    %534 = vmatprep.subr.bf16.mxu0 0
    %535 = vmatpush1.bf16.xpose.msra.mxu0 0
    %536 = vmatprep.subr.bf16.mxu0 0
    %537 = vmatpush1.bf16.xpose.msra.mxu0 0
    %538 = vmatprep.subr.bf16.mxu0 0
    %539 = vmatpush1.bf16.xpose.msra.mxu0 0
    %540 = vmatprep.subr.bf16.mxu0 0
    %541 = vmatpush1.bf16.xpose.msra.mxu0 0
    %542 = vmatprep.subr.bf16.mxu0 0
    %543 = vmatpush1.bf16.xpose.msra.mxu0 0
    %544 = vmatprep.subr.bf16.mxu0 0
    %545 = vmatpush1.bf16.xpose.msra.mxu0 0
    %546 = vmatprep.subr.bf16.mxu0 0
    %547 = vmatpush1.bf16.xpose.msra.mxu0 0
    %548 = vmatprep.subr.bf16.mxu0 0
    %549 = vmatpush1.bf16.xpose.msra.mxu0 %v532
    %550 = vmatprep.subr.bf16.mxu0 0
    %551 = vmatpush2.bf16.xpose.msra.mxu0 0
    %552 = vmatprep.subr.bf16.mxu0 0
    %553 = vmatpush2.bf16.xpose.msra.mxu0 0
    %554 = vmatprep.subr.bf16.mxu0 0
    %555 = vmatpush2.bf16.xpose.msra.mxu0 0
    %556 = vmatprep.subr.bf16.mxu0 0
    %557 = vmatpush2.bf16.xpose.msra.mxu0 0
    %558 = vmatprep.subr.bf16.mxu0 0
    %559 = vmatpush2.bf16.xpose.msra.mxu0 0
    %560 = vmatprep.subr.bf16.mxu0 0
    %561 = vmatpush2.bf16.xpose.msra.mxu0 0
    %562 = vmatprep.subr.bf16.mxu0 0
    %563 = vmatpush2.bf16.xpose.msra.mxu0 0
    %564 = vmatprep.subr.bf16.mxu0 0
    %565 = vmatpush2.bf16.xpose.msra.mxu0 0
    %566 = vmatprep.mubr.bf16.mxu0 0
    %567 = vmatmul.mubr.bf16.gmra.mxu0 %v529
    %v568 = vpop.f32.mrf.mxu0
    %v569 = vadd.f32 0.0, %v568
    %v570 = vpop.f32.mrf.mxu0
    %v571 = vpop.f32.mrf.mxu0
    %v572 = vpop.f32.mrf.mxu0
    %573 = vdwg.mxu0
    %v574 = vlaneseq
    %v575 = vand.u32 %v574, 127
    %vm576 = vcmp.ge.s32.totalorder %v180, %v575
    %v577 = vsel %vm576, 1, 0
    %vm578 = vcmp.eq.s32.totalorder %v577, 1
    %v579 = vsel %vm578, %v226, -1e+30
    %v580 = vsel %vm578, %v275, -1e+30
    %v581 = vsel %vm578, %v324, -1e+30
    %v582 = vsel %vm578, %v373, -1e+30
    %v583 = vsel %vm578, %v422, -1e+30
    %v584 = vsel %vm578, %v471, -1e+30
    %v585 = vsel %vm578, %v520, -1e+30
    %v586 = vsel %vm578, %v569, -1e+30
    %v587 = vsel %vm184, %v579, -inf
    %588 = vmax.xlane.f32.xlu0 %v587
    %v589 = vpop.xlane.xlu0 %588
    %v590 = vsel %vm184, %v580, -inf
    %591 = vmax.xlane.f32.xlu0 %v590
    %v592 = vpop.xlane.xlu0 %591
    %v593 = vsel %vm184, %v581, -inf
    %594 = vmax.xlane.f32.xlu0 %v593
    %v595 = vpop.xlane.xlu0 %594
    %v596 = vsel %vm184, %v582, -inf
    %597 = vmax.xlane.f32.xlu0 %v596
    %v598 = vpop.xlane.xlu0 %597
    %v599 = vsel %vm184, %v583, -inf
    %600 = vmax.xlane.f32.xlu0 %v599
    %v601 = vpop.xlane.xlu0 %600
    %v602 = vsel %vm184, %v584, -inf
    %603 = vmax.xlane.f32.xlu0 %v602
    %v604 = vpop.xlane.xlu0 %603
    %v605 = vsel %vm184, %v585, -inf
    %606 = vmax.xlane.f32.xlu0 %v605
    %v607 = vpop.xlane.xlu0 %606
    %v608 = vsel %vm184, %v586, -inf
    %609 = vmax.xlane.f32.xlu0 %v608
    %v610 = vpop.xlane.xlu0 %609
    %v611 = vsub.f32 %v579, %v589
    %v612 = vsub.f32 %v580, %v592
    %v613 = vsub.f32 %v581, %v595
    %v614 = vsub.f32 %v582, %v598
    %v615 = vsub.f32 %v583, %v601
    %v616 = vsub.f32 %v584, %v604
    %v617 = vsub.f32 %v585, %v607
    %v618 = vsub.f32 %v586, %v610
    %v619 = vmul.f32 %v611, 1.442695
    %v620 = vpow.pop %v619
    %v621 = vmul.f32 %v612, 1.442695
    %v622 = vpow.pop %v621
    %v623 = vmul.f32 %v613, 1.442695
    %v624 = vpow.pop %v623
    %v625 = vmul.f32 %v614, 1.442695
    %v626 = vpow.pop %v625
    %v627 = vmul.f32 %v615, 1.442695
    %v628 = vpow.pop %v627
    %v629 = vmul.f32 %v616, 1.442695
    %v630 = vpow.pop %v629
    %v631 = vmul.f32 %v617, 1.442695
    %v632 = vpow.pop %v631
    %v633 = vmul.f32 %v618, 1.442695
    %v634 = vpow.pop %v633
    %v635 = vsel %vm184, %v620, 0.0
    %636 = vadd.xlane.f32.xlu0 %v635
    %v637 = vpop.xlane.xlu0 %636
    %v638 = vsel %vm184, %v622, 0.0
    %639 = vadd.xlane.f32.xlu0 %v638
    %v640 = vpop.xlane.xlu0 %639
    %v641 = vsel %vm184, %v624, 0.0
    %642 = vadd.xlane.f32.xlu0 %v641
    %v643 = vpop.xlane.xlu0 %642
    %v644 = vsel %vm184, %v626, 0.0
    %645 = vadd.xlane.f32.xlu0 %v644
    %v646 = vpop.xlane.xlu0 %645
    %v647 = vsel %vm184, %v628, 0.0
    %648 = vadd.xlane.f32.xlu0 %v647
    %v649 = vpop.xlane.xlu0 %648
    %v650 = vsel %vm184, %v630, 0.0
    %651 = vadd.xlane.f32.xlu0 %v650
    %v652 = vpop.xlane.xlu0 %651
    %v653 = vsel %vm184, %v632, 0.0
    %654 = vadd.xlane.f32.xlu0 %v653
    %v655 = vpop.xlane.xlu0 %654
    %v656 = vsel %vm184, %v634, 0.0
    %657 = vadd.xlane.f32.xlu0 %v656
    %v658 = vpop.xlane.xlu0 %657
    %v659 = vpack.c.bf16 %v620, %v620
    %v660 = vpack.c.bf16 %v622, %v622
    %v661 = vpack.c.bf16 %v624, %v624
    %v662 = vpack.c.bf16 %v626, %v626
    %v663 = vpack.c.bf16 %v628, %v628
    %v664 = vpack.c.bf16 %v630, %v630
    %v665 = vpack.c.bf16 %v632, %v632
    %v666 = vpack.c.bf16 %v634, %v634
    %667 = vrot.lane.b32.xlu0 %v171, 64
    %v668 = vpop.permute.xlu0 %667
    %v670 = vsel %vm184, %v659, 0
    %vm672 = vcmask 1043456
    %v674 = vsel %vm672, %v668, 0
    %676 = vmatprep.subr.bf16.mxu0 0
    %677 = vmatpush1.bf16.msra.mxu0 0
    %678 = vmatprep.subr.bf16.mxu0 0
    %679 = vmatpush1.bf16.msra.mxu0 0
    %680 = vmatprep.subr.bf16.mxu0 0
    %681 = vmatpush1.bf16.msra.mxu0 0
    %682 = vmatprep.subr.bf16.mxu0 0
    %683 = vmatpush1.bf16.msra.mxu0 0
    %684 = vmatprep.subr.bf16.mxu0 0
    %685 = vmatpush1.bf16.msra.mxu0 0
    %686 = vmatprep.subr.bf16.mxu0 0
    %687 = vmatpush1.bf16.msra.mxu0 0
    %688 = vmatprep.subr.bf16.mxu0 0
    %689 = vmatpush1.bf16.msra.mxu0 0
    %690 = vmatprep.subr.bf16.mxu0 0
    %691 = vmatpush1.bf16.msra.mxu0 %v674
    %692 = vmatprep.subr.bf16.mxu0 0
    %693 = vmatpush2.bf16.msra.mxu0 0
    %694 = vmatprep.subr.bf16.mxu0 0
    %695 = vmatpush2.bf16.msra.mxu0 0
    %696 = vmatprep.subr.bf16.mxu0 0
    %697 = vmatpush2.bf16.msra.mxu0 0
    %698 = vmatprep.subr.bf16.mxu0 0
    %699 = vmatpush2.bf16.msra.mxu0 0
    %700 = vmatprep.subr.bf16.mxu0 0
    %701 = vmatpush2.bf16.msra.mxu0 0
    %702 = vmatprep.subr.bf16.mxu0 0
    %703 = vmatpush2.bf16.msra.mxu0 0
    %704 = vmatprep.subr.bf16.mxu0 0
    %705 = vmatpush2.bf16.msra.mxu0 0
    %706 = vmatprep.subr.bf16.mxu0 0
    %707 = vmatpush2.bf16.msra.mxu0 0
    %708 = vmatprep.mubr.bf16.mxu0 0
    %709 = vmatmul.mubr.bf16.gmra.mxu0 %v670
    %v710 = vpop.f32.mrf.mxu0
    %v711 = vadd.f32 0.0, %v710
    %v712 = vpop.f32.mrf.mxu0
    %v713 = vpop.f32.mrf.mxu0
    %v714 = vpop.f32.mrf.mxu0
    %715 = vdwg.mxu0
    %716 = vrot.lane.b32.xlu0 %v172, 64
    %v717 = vpop.permute.xlu0 %716
    %v719 = vsel %vm184, %v660, 0
    %v722 = vsel %vm672, %v717, 0
    %724 = vmatprep.subr.bf16.mxu0 0
    %725 = vmatpush1.bf16.msra.mxu0 0
    %726 = vmatprep.subr.bf16.mxu0 0
    %727 = vmatpush1.bf16.msra.mxu0 0
    %728 = vmatprep.subr.bf16.mxu0 0
    %729 = vmatpush1.bf16.msra.mxu0 0
    %730 = vmatprep.subr.bf16.mxu0 0
    %731 = vmatpush1.bf16.msra.mxu0 0
    %732 = vmatprep.subr.bf16.mxu0 0
    %733 = vmatpush1.bf16.msra.mxu0 0
    %734 = vmatprep.subr.bf16.mxu0 0
    %735 = vmatpush1.bf16.msra.mxu0 0
    %736 = vmatprep.subr.bf16.mxu0 0
    %737 = vmatpush1.bf16.msra.mxu0 0
    %738 = vmatprep.subr.bf16.mxu0 0
    %739 = vmatpush1.bf16.msra.mxu0 %v722
    %740 = vmatprep.subr.bf16.mxu0 0
    %741 = vmatpush2.bf16.msra.mxu0 0
    %742 = vmatprep.subr.bf16.mxu0 0
    %743 = vmatpush2.bf16.msra.mxu0 0
    %744 = vmatprep.subr.bf16.mxu0 0
    %745 = vmatpush2.bf16.msra.mxu0 0
    %746 = vmatprep.subr.bf16.mxu0 0
    %747 = vmatpush2.bf16.msra.mxu0 0
    %748 = vmatprep.subr.bf16.mxu0 0
    %749 = vmatpush2.bf16.msra.mxu0 0
    %750 = vmatprep.subr.bf16.mxu0 0
    %751 = vmatpush2.bf16.msra.mxu0 0
    %752 = vmatprep.subr.bf16.mxu0 0
    %753 = vmatpush2.bf16.msra.mxu0 0
    %754 = vmatprep.subr.bf16.mxu0 0
    %755 = vmatpush2.bf16.msra.mxu0 0
    %756 = vmatprep.mubr.bf16.mxu0 0
    %757 = vmatmul.mubr.bf16.gmra.mxu0 %v719
    %v758 = vpop.f32.mrf.mxu0
    %v759 = vadd.f32 0.0, %v758
    %v760 = vpop.f32.mrf.mxu0
    %v761 = vpop.f32.mrf.mxu0
    %v762 = vpop.f32.mrf.mxu0
    %763 = vdwg.mxu0
    %764 = vrot.lane.b32.xlu0 %v173, 64
    %v765 = vpop.permute.xlu0 %764
    %v767 = vsel %vm184, %v661, 0
    %v770 = vsel %vm672, %v765, 0
    %772 = vmatprep.subr.bf16.mxu0 0
    %773 = vmatpush1.bf16.msra.mxu0 0
    %774 = vmatprep.subr.bf16.mxu0 0
    %775 = vmatpush1.bf16.msra.mxu0 0
    %776 = vmatprep.subr.bf16.mxu0 0
    %777 = vmatpush1.bf16.msra.mxu0 0
    %778 = vmatprep.subr.bf16.mxu0 0
    %779 = vmatpush1.bf16.msra.mxu0 0
    %780 = vmatprep.subr.bf16.mxu0 0
    %781 = vmatpush1.bf16.msra.mxu0 0
    %782 = vmatprep.subr.bf16.mxu0 0
    %783 = vmatpush1.bf16.msra.mxu0 0
    %784 = vmatprep.subr.bf16.mxu0 0
    %785 = vmatpush1.bf16.msra.mxu0 0
    %786 = vmatprep.subr.bf16.mxu0 0
    %787 = vmatpush1.bf16.msra.mxu0 %v770
    %788 = vmatprep.subr.bf16.mxu0 0
    %789 = vmatpush2.bf16.msra.mxu0 0
    %790 = vmatprep.subr.bf16.mxu0 0
    %791 = vmatpush2.bf16.msra.mxu0 0
    %792 = vmatprep.subr.bf16.mxu0 0
    %793 = vmatpush2.bf16.msra.mxu0 0
    %794 = vmatprep.subr.bf16.mxu0 0
    %795 = vmatpush2.bf16.msra.mxu0 0
    %796 = vmatprep.subr.bf16.mxu0 0
    %797 = vmatpush2.bf16.msra.mxu0 0
    %798 = vmatprep.subr.bf16.mxu0 0
    %799 = vmatpush2.bf16.msra.mxu0 0
    %800 = vmatprep.subr.bf16.mxu0 0
    %801 = vmatpush2.bf16.msra.mxu0 0
    %802 = vmatprep.subr.bf16.mxu0 0
    %803 = vmatpush2.bf16.msra.mxu0 0
    %804 = vmatprep.mubr.bf16.mxu0 0
    %805 = vmatmul.mubr.bf16.gmra.mxu0 %v767
    %v806 = vpop.f32.mrf.mxu0
    %v807 = vadd.f32 0.0, %v806
    %v808 = vpop.f32.mrf.mxu0
    %v809 = vpop.f32.mrf.mxu0
    %v810 = vpop.f32.mrf.mxu0
    %811 = vdwg.mxu0
    %812 = vrot.lane.b32.xlu0 %v174, 64
    %v813 = vpop.permute.xlu0 %812
    %v815 = vsel %vm184, %v662, 0
    %v818 = vsel %vm672, %v813, 0
    %820 = vmatprep.subr.bf16.mxu0 0
    %821 = vmatpush1.bf16.msra.mxu0 0
    %822 = vmatprep.subr.bf16.mxu0 0
    %823 = vmatpush1.bf16.msra.mxu0 0
    %824 = vmatprep.subr.bf16.mxu0 0
    %825 = vmatpush1.bf16.msra.mxu0 0
    %826 = vmatprep.subr.bf16.mxu0 0
    %827 = vmatpush1.bf16.msra.mxu0 0
    %828 = vmatprep.subr.bf16.mxu0 0
    %829 = vmatpush1.bf16.msra.mxu0 0
    %830 = vmatprep.subr.bf16.mxu0 0
    %831 = vmatpush1.bf16.msra.mxu0 0
    %832 = vmatprep.subr.bf16.mxu0 0
    %833 = vmatpush1.bf16.msra.mxu0 0
    %834 = vmatprep.subr.bf16.mxu0 0
    %835 = vmatpush1.bf16.msra.mxu0 %v818
    %836 = vmatprep.subr.bf16.mxu0 0
    %837 = vmatpush2.bf16.msra.mxu0 0
    %838 = vmatprep.subr.bf16.mxu0 0
    %839 = vmatpush2.bf16.msra.mxu0 0
    %840 = vmatprep.subr.bf16.mxu0 0
    %841 = vmatpush2.bf16.msra.mxu0 0
    %842 = vmatprep.subr.bf16.mxu0 0
    %843 = vmatpush2.bf16.msra.mxu0 0
    %844 = vmatprep.subr.bf16.mxu0 0
    %845 = vmatpush2.bf16.msra.mxu0 0
    %846 = vmatprep.subr.bf16.mxu0 0
    %847 = vmatpush2.bf16.msra.mxu0 0
    %848 = vmatprep.subr.bf16.mxu0 0
    %849 = vmatpush2.bf16.msra.mxu0 0
    %850 = vmatprep.subr.bf16.mxu0 0
    %851 = vmatpush2.bf16.msra.mxu0 0
    %852 = vmatprep.mubr.bf16.mxu0 0
    %853 = vmatmul.mubr.bf16.gmra.mxu0 %v815
    %v854 = vpop.f32.mrf.mxu0
    %v855 = vadd.f32 0.0, %v854
    %v856 = vpop.f32.mrf.mxu0
    %v857 = vpop.f32.mrf.mxu0
    %v858 = vpop.f32.mrf.mxu0
    %859 = vdwg.mxu0
    %860 = vrot.lane.b32.xlu0 %v175, 64
    %v861 = vpop.permute.xlu0 %860
    %v863 = vsel %vm184, %v663, 0
    %v866 = vsel %vm672, %v861, 0
    %868 = vmatprep.subr.bf16.mxu0 0
    %869 = vmatpush1.bf16.msra.mxu0 0
    %870 = vmatprep.subr.bf16.mxu0 0
    %871 = vmatpush1.bf16.msra.mxu0 0
    %872 = vmatprep.subr.bf16.mxu0 0
    %873 = vmatpush1.bf16.msra.mxu0 0
    %874 = vmatprep.subr.bf16.mxu0 0
    %875 = vmatpush1.bf16.msra.mxu0 0
    %876 = vmatprep.subr.bf16.mxu0 0
    %877 = vmatpush1.bf16.msra.mxu0 0
    %878 = vmatprep.subr.bf16.mxu0 0
    %879 = vmatpush1.bf16.msra.mxu0 0
    %880 = vmatprep.subr.bf16.mxu0 0
    %881 = vmatpush1.bf16.msra.mxu0 0
    %882 = vmatprep.subr.bf16.mxu0 0
    %883 = vmatpush1.bf16.msra.mxu0 %v866
    %884 = vmatprep.subr.bf16.mxu0 0
    %885 = vmatpush2.bf16.msra.mxu0 0
    %886 = vmatprep.subr.bf16.mxu0 0
    %887 = vmatpush2.bf16.msra.mxu0 0
    %888 = vmatprep.subr.bf16.mxu0 0
    %889 = vmatpush2.bf16.msra.mxu0 0
    %890 = vmatprep.subr.bf16.mxu0 0
    %891 = vmatpush2.bf16.msra.mxu0 0
    %892 = vmatprep.subr.bf16.mxu0 0
    %893 = vmatpush2.bf16.msra.mxu0 0
    %894 = vmatprep.subr.bf16.mxu0 0
    %895 = vmatpush2.bf16.msra.mxu0 0
    %896 = vmatprep.subr.bf16.mxu0 0
    %897 = vmatpush2.bf16.msra.mxu0 0
    %898 = vmatprep.subr.bf16.mxu0 0
    %899 = vmatpush2.bf16.msra.mxu0 0
    %900 = vmatprep.mubr.bf16.mxu0 0
    %901 = vmatmul.mubr.bf16.gmra.mxu0 %v863
    %v902 = vpop.f32.mrf.mxu0
    %v903 = vadd.f32 0.0, %v902
    %v904 = vpop.f32.mrf.mxu0
    %v905 = vpop.f32.mrf.mxu0
    %v906 = vpop.f32.mrf.mxu0
    %907 = vdwg.mxu0
    %908 = vrot.lane.b32.xlu0 %v176, 64
    %v909 = vpop.permute.xlu0 %908
    %v911 = vsel %vm184, %v664, 0
    %v914 = vsel %vm672, %v909, 0
    %916 = vmatprep.subr.bf16.mxu0 0
    %917 = vmatpush1.bf16.msra.mxu0 0
    %918 = vmatprep.subr.bf16.mxu0 0
    %919 = vmatpush1.bf16.msra.mxu0 0
    %920 = vmatprep.subr.bf16.mxu0 0
    %921 = vmatpush1.bf16.msra.mxu0 0
    %922 = vmatprep.subr.bf16.mxu0 0
    %923 = vmatpush1.bf16.msra.mxu0 0
    %924 = vmatprep.subr.bf16.mxu0 0
    %925 = vmatpush1.bf16.msra.mxu0 0
    %926 = vmatprep.subr.bf16.mxu0 0
    %927 = vmatpush1.bf16.msra.mxu0 0
    %928 = vmatprep.subr.bf16.mxu0 0
    %929 = vmatpush1.bf16.msra.mxu0 0
    %930 = vmatprep.subr.bf16.mxu0 0
    %931 = vmatpush1.bf16.msra.mxu0 %v914
    %932 = vmatprep.subr.bf16.mxu0 0
    %933 = vmatpush2.bf16.msra.mxu0 0
    %934 = vmatprep.subr.bf16.mxu0 0
    %935 = vmatpush2.bf16.msra.mxu0 0
    %936 = vmatprep.subr.bf16.mxu0 0
    %937 = vmatpush2.bf16.msra.mxu0 0
    %938 = vmatprep.subr.bf16.mxu0 0
    %939 = vmatpush2.bf16.msra.mxu0 0
    %940 = vmatprep.subr.bf16.mxu0 0
    %941 = vmatpush2.bf16.msra.mxu0 0
    %942 = vmatprep.subr.bf16.mxu0 0
    %943 = vmatpush2.bf16.msra.mxu0 0
    %944 = vmatprep.subr.bf16.mxu0 0
    %945 = vmatpush2.bf16.msra.mxu0 0
    %946 = vmatprep.subr.bf16.mxu0 0
    %947 = vmatpush2.bf16.msra.mxu0 0
    %948 = vmatprep.mubr.bf16.mxu0 0
    %949 = vmatmul.mubr.bf16.gmra.mxu0 %v911
    %v950 = vpop.f32.mrf.mxu0
    %v951 = vadd.f32 0.0, %v950
    %v952 = vpop.f32.mrf.mxu0
    %v953 = vpop.f32.mrf.mxu0
    %v954 = vpop.f32.mrf.mxu0
    %955 = vdwg.mxu0
    %956 = vrot.lane.b32.xlu0 %v177, 64
    %v957 = vpop.permute.xlu0 %956
    %v959 = vsel %vm184, %v665, 0
    %v962 = vsel %vm672, %v957, 0
    %964 = vmatprep.subr.bf16.mxu0 0
    %965 = vmatpush1.bf16.msra.mxu0 0
    %966 = vmatprep.subr.bf16.mxu0 0
    %967 = vmatpush1.bf16.msra.mxu0 0
    %968 = vmatprep.subr.bf16.mxu0 0
    %969 = vmatpush1.bf16.msra.mxu0 0
    %970 = vmatprep.subr.bf16.mxu0 0
    %971 = vmatpush1.bf16.msra.mxu0 0
    %972 = vmatprep.subr.bf16.mxu0 0
    %973 = vmatpush1.bf16.msra.mxu0 0
    %974 = vmatprep.subr.bf16.mxu0 0
    %975 = vmatpush1.bf16.msra.mxu0 0
    %976 = vmatprep.subr.bf16.mxu0 0
    %977 = vmatpush1.bf16.msra.mxu0 0
    %978 = vmatprep.subr.bf16.mxu0 0
    %979 = vmatpush1.bf16.msra.mxu0 %v962
    %980 = vmatprep.subr.bf16.mxu0 0
    %981 = vmatpush2.bf16.msra.mxu0 0
    %982 = vmatprep.subr.bf16.mxu0 0
    %983 = vmatpush2.bf16.msra.mxu0 0
    %984 = vmatprep.subr.bf16.mxu0 0
    %985 = vmatpush2.bf16.msra.mxu0 0
    %986 = vmatprep.subr.bf16.mxu0 0
    %987 = vmatpush2.bf16.msra.mxu0 0
    %988 = vmatprep.subr.bf16.mxu0 0
    %989 = vmatpush2.bf16.msra.mxu0 0
    %990 = vmatprep.subr.bf16.mxu0 0
    %991 = vmatpush2.bf16.msra.mxu0 0
    %992 = vmatprep.subr.bf16.mxu0 0
    %993 = vmatpush2.bf16.msra.mxu0 0
    %994 = vmatprep.subr.bf16.mxu0 0
    %995 = vmatpush2.bf16.msra.mxu0 0
    %996 = vmatprep.mubr.bf16.mxu0 0
    %997 = vmatmul.mubr.bf16.gmra.mxu0 %v959
    %v998 = vpop.f32.mrf.mxu0
    %v999 = vadd.f32 0.0, %v998
    %v1000 = vpop.f32.mrf.mxu0
    %v1001 = vpop.f32.mrf.mxu0
    %v1002 = vpop.f32.mrf.mxu0
    %1003 = vdwg.mxu0
    %1004 = vrot.lane.b32.xlu0 %v178, 64
    %v1005 = vpop.permute.xlu0 %1004
    %v1007 = vsel %vm184, %v666, 0
    %v1010 = vsel %vm672, %v1005, 0
    %1012 = vmatprep.subr.bf16.mxu0 0
    %1013 = vmatpush1.bf16.msra.mxu0 0
    %1014 = vmatprep.subr.bf16.mxu0 0
    %1015 = vmatpush1.bf16.msra.mxu0 0
    %1016 = vmatprep.subr.bf16.mxu0 0
    %1017 = vmatpush1.bf16.msra.mxu0 0
    %1018 = vmatprep.subr.bf16.mxu0 0
    %1019 = vmatpush1.bf16.msra.mxu0 0
    %1020 = vmatprep.subr.bf16.mxu0 0
    %1021 = vmatpush1.bf16.msra.mxu0 0
    %1022 = vmatprep.subr.bf16.mxu0 0
    %1023 = vmatpush1.bf16.msra.mxu0 0
    %1024 = vmatprep.subr.bf16.mxu0 0
    %1025 = vmatpush1.bf16.msra.mxu0 0
    %1026 = vmatprep.subr.bf16.mxu0 0
    %1027 = vmatpush1.bf16.msra.mxu0 %v1010
    %1028 = vmatprep.subr.bf16.mxu0 0
    %1029 = vmatpush2.bf16.msra.mxu0 0
    %1030 = vmatprep.subr.bf16.mxu0 0
    %1031 = vmatpush2.bf16.msra.mxu0 0
    %1032 = vmatprep.subr.bf16.mxu0 0
    %1033 = vmatpush2.bf16.msra.mxu0 0
    %1034 = vmatprep.subr.bf16.mxu0 0
    %1035 = vmatpush2.bf16.msra.mxu0 0
    %1036 = vmatprep.subr.bf16.mxu0 0
    %1037 = vmatpush2.bf16.msra.mxu0 0
    %1038 = vmatprep.subr.bf16.mxu0 0
    %1039 = vmatpush2.bf16.msra.mxu0 0
    %1040 = vmatprep.subr.bf16.mxu0 0
    %1041 = vmatpush2.bf16.msra.mxu0 0
    %1042 = vmatprep.subr.bf16.mxu0 0
    %1043 = vmatpush2.bf16.msra.mxu0 0
    %1044 = vmatprep.mubr.bf16.mxu0 0
    %1045 = vmatmul.mubr.bf16.gmra.mxu0 %v1007
    %v1046 = vpop.f32.mrf.mxu0
    %v1047 = vadd.f32 0.0, %v1046
    %v1048 = vpop.f32.mrf.mxu0
    %v1049 = vpop.f32.mrf.mxu0
    %v1050 = vpop.f32.mrf.mxu0
    %1051 = vdwg.mxu0
    %v1052 = vrcp.pop %v637
    %v1053 = vrcp.pop %v640
    %v1054 = vrcp.pop %v643
    %v1055 = vrcp.pop %v646
    %v1056 = vrcp.pop %v649
    %v1057 = vrcp.pop %v652
    %v1058 = vrcp.pop %v655
    %v1059 = vrcp.pop %v658
    %v1060 = vmul.f32 %v711, %v1052
    %v1061 = vmul.f32 %v759, %v1053
    %v1062 = vmul.f32 %v807, %v1054
    %v1063 = vmul.f32 %v855, %v1055
    %v1064 = vmul.f32 %v903, %v1056
    %v1065 = vmul.f32 %v951, %v1057
    %v1066 = vmul.f32 %v999, %v1058
    %v1067 = vmul.f32 %v1047, %v1059
    %v1068 = vpack.c.bf16 %v1061, %v1060
    %v1069 = vpack.c.bf16 %v1063, %v1062
    %v1070 = vpack.c.bf16 %v1065, %v1064
    %v1071 = vpack.c.bf16 %v1067, %v1066
    %v1072 = vld [vmem:[#allocation7] sm:$0xf]
    %v1073 = vld [vmem:[#allocation7 + $0x4] sm:$0xf]
    %v1074 = vld [vmem:[#allocation7 + $0x8] sm:$0xf]
    %v1075 = vld [vmem:[#allocation7 + $0xc] sm:$0xf]
    %v1077 = vsel %vm184, %v1068, 0
    %v1080 = vsel %vm672, %v1072, 0
    %1082 = vmatprep.subr.bf16.mxu0 0
    %1083 = vmatpush1.bf16.msra.mxu0 0
    %1084 = vmatprep.subr.bf16.mxu0 0
    %1085 = vmatpush1.bf16.msra.mxu0 0
    %1086 = vmatprep.subr.bf16.mxu0 0
    %1087 = vmatpush1.bf16.msra.mxu0 0
    %1088 = vmatprep.subr.bf16.mxu0 0
    %1089 = vmatpush1.bf16.msra.mxu0 0
    %1090 = vmatprep.subr.bf16.mxu0 0
    %1091 = vmatpush1.bf16.msra.mxu0 0
    %1092 = vmatprep.subr.bf16.mxu0 0
    %1093 = vmatpush1.bf16.msra.mxu0 0
    %1094 = vmatprep.subr.bf16.mxu0 0
    %1095 = vmatpush1.bf16.msra.mxu0 0
    %1096 = vmatprep.subr.bf16.mxu0 0
    %1097 = vmatpush1.bf16.msra.mxu0 %v1080
    %1098 = vmatprep.subr.bf16.mxu0 0
    %1099 = vmatpush2.bf16.msra.mxu0 0
    %1100 = vmatprep.subr.bf16.mxu0 0
    %1101 = vmatpush2.bf16.msra.mxu0 0
    %1102 = vmatprep.subr.bf16.mxu0 0
    %1103 = vmatpush2.bf16.msra.mxu0 0
    %1104 = vmatprep.subr.bf16.mxu0 0
    %1105 = vmatpush2.bf16.msra.mxu0 0
    %1106 = vmatprep.subr.bf16.mxu0 0
    %1107 = vmatpush2.bf16.msra.mxu0 0
    %1108 = vmatprep.subr.bf16.mxu0 0
    %1109 = vmatpush2.bf16.msra.mxu0 0
    %1110 = vmatprep.subr.bf16.mxu0 0
    %1111 = vmatpush2.bf16.msra.mxu0 0
    %1112 = vmatprep.subr.bf16.mxu0 0
    %1113 = vmatpush2.bf16.msra.mxu0 0
    %1114 = vmatprep.mubr.bf16.mxu0 0
    %1115 = vmatmul.mubr.bf16.gmra.mxu0 %v1077
    %v1116 = vpop.f32.mrf.mxu0
    %v1117 = vadd.f32 0.0, %v1116
    %v1118 = vpop.f32.mrf.mxu0
    %v1119 = vpop.f32.mrf.mxu0
    %v1120 = vadd.f32 0.0, %v1119
    %v1121 = vpop.f32.mrf.mxu0
    %1122 = vdwg.mxu0
    %v1124 = vsel %vm184, %v1069, 0
    %v1127 = vsel %vm672, %v1073, 0
    %1129 = vmatprep.subr.bf16.mxu0 0
    %1130 = vmatpush1.bf16.msra.mxu0 0
    %1131 = vmatprep.subr.bf16.mxu0 0
    %1132 = vmatpush1.bf16.msra.mxu0 0
    %1133 = vmatprep.subr.bf16.mxu0 0
    %1134 = vmatpush1.bf16.msra.mxu0 0
    %1135 = vmatprep.subr.bf16.mxu0 0
    %1136 = vmatpush1.bf16.msra.mxu0 0
    %1137 = vmatprep.subr.bf16.mxu0 0
    %1138 = vmatpush1.bf16.msra.mxu0 0
    %1139 = vmatprep.subr.bf16.mxu0 0
    %1140 = vmatpush1.bf16.msra.mxu0 0
    %1141 = vmatprep.subr.bf16.mxu0 0
    %1142 = vmatpush1.bf16.msra.mxu0 0
    %1143 = vmatprep.subr.bf16.mxu0 0
    %1144 = vmatpush1.bf16.msra.mxu0 %v1127
    %1145 = vmatprep.subr.bf16.mxu0 0
    %1146 = vmatpush2.bf16.msra.mxu0 0
    %1147 = vmatprep.subr.bf16.mxu0 0
    %1148 = vmatpush2.bf16.msra.mxu0 0
    %1149 = vmatprep.subr.bf16.mxu0 0
    %1150 = vmatpush2.bf16.msra.mxu0 0
    %1151 = vmatprep.subr.bf16.mxu0 0
    %1152 = vmatpush2.bf16.msra.mxu0 0
    %1153 = vmatprep.subr.bf16.mxu0 0
    %1154 = vmatpush2.bf16.msra.mxu0 0
    %1155 = vmatprep.subr.bf16.mxu0 0
    %1156 = vmatpush2.bf16.msra.mxu0 0
    %1157 = vmatprep.subr.bf16.mxu0 0
    %1158 = vmatpush2.bf16.msra.mxu0 0
    %1159 = vmatprep.subr.bf16.mxu0 0
    %1160 = vmatpush2.bf16.msra.mxu0 0
    %1161 = vmatprep.mubr.bf16.mxu0 0
    %1162 = vmatmul.mubr.bf16.gmra.mxu0 %v1124
    %v1163 = vpop.f32.mrf.mxu0
    %v1164 = vadd.f32 0.0, %v1163
    %v1165 = vpop.f32.mrf.mxu0
    %v1166 = vpop.f32.mrf.mxu0
    %v1167 = vadd.f32 0.0, %v1166
    %v1168 = vpop.f32.mrf.mxu0
    %1169 = vdwg.mxu0
    %v1171 = vsel %vm184, %v1070, 0
    %v1174 = vsel %vm672, %v1074, 0
    %1176 = vmatprep.subr.bf16.mxu0 0
    %1177 = vmatpush1.bf16.msra.mxu0 0
    %1178 = vmatprep.subr.bf16.mxu0 0
    %1179 = vmatpush1.bf16.msra.mxu0 0
    %1180 = vmatprep.subr.bf16.mxu0 0
    %1181 = vmatpush1.bf16.msra.mxu0 0
    %1182 = vmatprep.subr.bf16.mxu0 0
    %1183 = vmatpush1.bf16.msra.mxu0 0
    %1184 = vmatprep.subr.bf16.mxu0 0
    %1185 = vmatpush1.bf16.msra.mxu0 0
    %1186 = vmatprep.subr.bf16.mxu0 0
    %1187 = vmatpush1.bf16.msra.mxu0 0
    %1188 = vmatprep.subr.bf16.mxu0 0
    %1189 = vmatpush1.bf16.msra.mxu0 0
    %1190 = vmatprep.subr.bf16.mxu0 0
    %1191 = vmatpush1.bf16.msra.mxu0 %v1174
    %1192 = vmatprep.subr.bf16.mxu0 0
    %1193 = vmatpush2.bf16.msra.mxu0 0
    %1194 = vmatprep.subr.bf16.mxu0 0
    %1195 = vmatpush2.bf16.msra.mxu0 0
    %1196 = vmatprep.subr.bf16.mxu0 0
    %1197 = vmatpush2.bf16.msra.mxu0 0
    %1198 = vmatprep.subr.bf16.mxu0 0
    %1199 = vmatpush2.bf16.msra.mxu0 0
    %1200 = vmatprep.subr.bf16.mxu0 0
    %1201 = vmatpush2.bf16.msra.mxu0 0
    %1202 = vmatprep.subr.bf16.mxu0 0
    %1203 = vmatpush2.bf16.msra.mxu0 0
    %1204 = vmatprep.subr.bf16.mxu0 0
    %1205 = vmatpush2.bf16.msra.mxu0 0
    %1206 = vmatprep.subr.bf16.mxu0 0
    %1207 = vmatpush2.bf16.msra.mxu0 0
    %1208 = vmatprep.mubr.bf16.mxu0 0
    %1209 = vmatmul.mubr.bf16.gmra.mxu0 %v1171
    %v1210 = vpop.f32.mrf.mxu0
    %v1211 = vadd.f32 0.0, %v1210
    %v1212 = vpop.f32.mrf.mxu0
    %v1213 = vpop.f32.mrf.mxu0
    %v1214 = vadd.f32 0.0, %v1213
    %v1215 = vpop.f32.mrf.mxu0
    %1216 = vdwg.mxu0
    %v1218 = vsel %vm184, %v1071, 0
    %v1221 = vsel %vm672, %v1075, 0
    %1223 = vmatprep.subr.bf16.mxu0 0
    %1224 = vmatpush1.bf16.msra.mxu0 0
    %1225 = vmatprep.subr.bf16.mxu0 0
    %1226 = vmatpush1.bf16.msra.mxu0 0
    %1227 = vmatprep.subr.bf16.mxu0 0
    %1228 = vmatpush1.bf16.msra.mxu0 0
    %1229 = vmatprep.subr.bf16.mxu0 0
    %1230 = vmatpush1.bf16.msra.mxu0 0
    %1231 = vmatprep.subr.bf16.mxu0 0
    %1232 = vmatpush1.bf16.msra.mxu0 0
    %1233 = vmatprep.subr.bf16.mxu0 0
    %1234 = vmatpush1.bf16.msra.mxu0 0
    %1235 = vmatprep.subr.bf16.mxu0 0
    %1236 = vmatpush1.bf16.msra.mxu0 0
    %1237 = vmatprep.subr.bf16.mxu0 0
    %1238 = vmatpush1.bf16.msra.mxu0 %v1221
    %1239 = vmatprep.subr.bf16.mxu0 0
    %1240 = vmatpush2.bf16.msra.mxu0 0
    %1241 = vmatprep.subr.bf16.mxu0 0
    %1242 = vmatpush2.bf16.msra.mxu0 0
    %1243 = vmatprep.subr.bf16.mxu0 0
    %1244 = vmatpush2.bf16.msra.mxu0 0
    %1245 = vmatprep.subr.bf16.mxu0 0
    %1246 = vmatpush2.bf16.msra.mxu0 0
    %1247 = vmatprep.subr.bf16.mxu0 0
    %1248 = vmatpush2.bf16.msra.mxu0 0
    %1249 = vmatprep.subr.bf16.mxu0 0
    %1250 = vmatpush2.bf16.msra.mxu0 0
    %1251 = vmatprep.subr.bf16.mxu0 0
    %1252 = vmatpush2.bf16.msra.mxu0 0
    %1253 = vmatprep.subr.bf16.mxu0 0
    %1254 = vmatpush2.bf16.msra.mxu0 0
    %1255 = vmatprep.mubr.bf16.mxu0 0
    %1256 = vmatmul.mubr.bf16.gmra.mxu0 %v1218
    %v1257 = vpop.f32.mrf.mxu0
    %v1258 = vadd.f32 0.0, %v1257
    %v1259 = vpop.f32.mrf.mxu0
    %v1260 = vpop.f32.mrf.mxu0
    %v1261 = vadd.f32 0.0, %v1260
    %v1262 = vpop.f32.mrf.mxu0
    %1263 = vdwg.mxu0
    %v1264 = vsel %vm76, %v1117, 0.0
    %v1265 = vsel %vm76, %v1164, 0.0
    %v1266 = vadd.f32 %v1264, %v1265
    %v1267 = vsel %vm76, %v1211, 0.0
    %v1268 = vadd.f32 %v1266, %v1267
    %v1269 = vsel %vm76, %v1258, 0.0
    %v1270 = vadd.f32 %v1268, %v1269
    %v1271 = vsel %vm76, %v1120, 0.0
    %v1272 = vsel %vm76, %v1167, 0.0
    %v1273 = vadd.f32 %v1271, %v1272
    %v1274 = vsel %vm76, %v1214, 0.0
    %v1275 = vadd.f32 %v1273, %v1274
    %v1276 = vsel %vm76, %v1261, 0.0
    %v1277 = vadd.f32 %v1275, %v1276
    %1278 = vst.msk [vmem:[#allocation8] sm:$0xff] %vm76, %v1270
    %1279 = vst.msk [vmem:[#allocation8 + $0x8] sm:$0xff] %vm76, %v1277
    // Predicated region
    $region26: #{tpu_custom_call.1} parent=1 // pred_check
      _
    $region27: #{tpu_custom_call.1} parent=1 // pred_check_branch
      %1281 = sbr.rel (0) target = $region29
    $region28: #{tpu_custom_call.1} parent=1 // pred_region
      %s1283 = ssub.s32 256, 256
      %1284 = vsyncadd [#allocation4], %s1283
      %s1285 = sshll.u32 [#allocation8], 4
      %s1286 = int_to_ptr.vmem [resolvable:$true] %s1285
      %1291 = dma.vmem_to_hbm [thread:$0]  %s1286, 256, %s3, [#allocation4], 128, 128, 8
    $region29: #{tpu_custom_call.1} parent=1 // pred_fallthru
      _
    // Predicated region
    $region30: #{tpu_custom_call.1} parent=1 // pred_check
      _
    $region31: #{tpu_custom_call.1} parent=1 // pred_check_branch
      %1293 = sbr.rel (0) target = $region33
    $region32: #{tpu_custom_call.1} parent=1 // pred_region
      %1294 = dma.done [#allocation4], 256
    $region33: #{tpu_custom_call.1} parent=1 // pred_fallthru
      _
    %1295 = vsyncpa [#allocation3], 1
    %1296 = vsyncpa [#allocation6], 1
    %1297 = vsyncpa [#allocation4], 1

</llo_original>
